<compile_context>
chip_gen: v6e
topology: v6e:2x2x1
jax: 0.10.0
libtpu: 0.0.40
codegen_flags: <defaults>
</compile_context>

<pallas_src>
import jax
import jax.numpy as jnp
from jax.experimental import pallas as pl
from jax.experimental.pallas import tpu as pltpu

LANE = 128
SUBLANE = 8
TARGET_BLOCK_BYTES = 4 * 1024 * 1024     # ~4 MiB per input per grid step
VMEM_LIMIT_BYTES = 64 << 20


def _round_up(x, m):
    return ((x + m - 1) // m) * m


def _num_tensorcores():
    """2-way row split only on 2-TensorCore chips (v7x); 1 elsewhere."""
    try:
        kind = jax.devices()[0].device_kind.lower()
    except Exception:
        return 1
    return 2 if ("v7" in kind or "7x" in kind) else 1


def _make_sse_kernel(nrows, tm, bpc):
    """Per-core partial of sum((x - x_hat)^2); row count / tiling baked in statically."""
    folds = tm // SUBLANE

    def kernel(x_ref, xhat_ref, out_ref, acc_ref):
        c = pl.program_id(0)             # core-split axis
        i = pl.program_id(1)             # reduction axis

        @pl.when(i == 0)
        def _init():
            acc_ref[...] = jnp.zeros_like(acc_ref)

        # Inputs stay in native dtype in HBM; widen to f32 on the VPU here.
        d = x_ref[...].astype(jnp.float32) - xhat_ref[...].astype(jnp.float32)
        dd = d * d

        gb = c * bpc + i                 # global (unclamped) block index
        start = gb * tm

        # Fast path: block fully inside the valid rows -> no mask ops on the VALU.
        @pl.when(start + tm <= nrows)
        def _interior():
            acc_ref[...] += jnp.sum(dd.reshape(folds, SUBLANE, LANE), axis=0)

        # Boundary / fully-OOB block (ragged last block, clamped re-read from the
        # cdiv/core-split grid): select-mask rows past the true row count.
        @pl.when(start + tm > nrows)
        def _boundary():
            row = jax.lax.broadcasted_iota(jnp.int32, dd.shape, 0) + start
            ddm = jnp.where(row < nrows, dd, 0.0)   # keep as select (NaN-safe)
            acc_ref[...] += jnp.sum(ddm.reshape(folds, SUBLANE, LANE), axis=0)

        @pl.when(i == bpc - 1)
        def _finalize():
            out_ref[0] = acc_ref[...]

    return kernel


def sse_pallas(x, x_hat):
    """sum((x - x_hat)**2) as a streaming Pallas reduction; returns an f32 scalar."""
    assert x.shape == x_hat.shape
    flat = x.reshape(-1)
    flat_hat = x_hat.reshape(-1)
    n = flat.shape[0]

    R = n // LANE
    n_main = R * LANE

    # Ragged tail (<128 elements): plain jnp outside the kernel, no full pad copy.
    tail = jnp.float32(0.0)
    if n_main < n:
        dt = flat[n_main:].astype(jnp.float32) - flat_hat[n_main:].astype(jnp.float32)
        tail = jnp.sum(dt * dt)
    if R == 0:
        return tail

    xf = flat[:n_main].reshape(R, LANE)          # free view when n_main == n
    xh = flat_hat[:n_main].reshape(R, LANE)

    # Tile rows: round to the dtype's sublane pack, cap at ~TARGET_BLOCK_BYTES / input.
    itemsize = max(jnp.dtype(x.dtype).itemsize, jnp.dtype(x_hat.dtype).itemsize)
    pack = max(SUBLANE, 32 // itemsize)          # 8 (f32) / 16 (bf16) / 32 (int8, fp8)
    max_tm = _round_up(max(TARGET_BLOCK_BYTES // (LANE * itemsize), pack), pack)
    TM = min(max_tm, _round_up(R, pack))

    total_blocks = pl.cdiv(R, TM)
    ncores = min(_num_tensorcores(), total_blocks)
    bpc = pl.cdiv(total_blocks, ncores)          # blocks per core
    grid = (ncores, bpc)

    if ncores > 1:
        # Real 2-TensorCore split on v7x.
        sem = (pltpu.CORE_PARALLEL, pltpu.ARBITRARY)
    else:
        sem = (pltpu.ARBITRARY, pltpu.ARBITRARY)

    def in_map(c, i):
        # Clamp so fully-OOB blocks (from the cdiv/core-split grid) re-read the last
        # valid block; the in-kernel row mask zeroes their contribution.
        return (jnp.minimum(c * bpc + i, total_blocks - 1), 0)

    out = pl.pallas_call(
        _make_sse_kernel(R, TM, bpc),
        out_shape=jax.ShapeDtypeStruct((ncores, SUBLANE, LANE), jnp.float32),
        grid_spec=pltpu.PrefetchScalarGridSpec(
            num_scalar_prefetch=0,
            grid=grid,
            in_specs=[
                pl.BlockSpec((TM, LANE), in_map),
                pl.BlockSpec((TM, LANE), in_map),
            ],
            out_specs=pl.BlockSpec((1, SUBLANE, LANE), lambda c, i: (c, 0, 0)),
            scratch_shapes=[pltpu.VMEM((SUBLANE, LANE), jnp.float32)],
        ),
        compiler_params=pltpu.CompilerParams(
            dimension_semantics=sem,
            vmem_limit_bytes=VMEM_LIMIT_BYTES),
        cost_estimate=pl.CostEstimate(
            flops=3 * n_main,
            transcendentals=0,
            bytes_accessed=n_main * (jnp.dtype(x.dtype).itemsize
                                     + jnp.dtype(x_hat.dtype).itemsize)),
    )(xf, xh)

    # Single deferred cross-lane reduce over the tiny (ncores, 8, 128) partials.
    return jnp.sum(out) + tail


def vae_loss_pallas(x, x_hat, kl, beta=0.5):
    """((x - x_hat)**2).sum() + beta * kl  — matches VAELoss.forward()."""
    sse = sse_pallas(x, x_hat)
    return sse + jnp.asarray(beta, jnp.float32) * jnp.asarray(kl, jnp.float32)


# ----------------------------------------------------------------------------
# Tiny deterministic stand-in VAE "model" (plain JAX glue) so that forward()
# semantics -- x_hat = model(x), kl = model.encoder.kl -- can be reproduced.
# ----------------------------------------------------------------------------
def make_model(key, in_dim, latent_dim):
    k1, k2, k3 = jax.random.split(key, 3)
    return {
        "w_mu": 0.02 * jax.random.normal(k1, (in_dim, latent_dim), jnp.float32),
        "w_sig": 0.02 * jax.random.normal(k2, (in_dim, latent_dim), jnp.float32),
        "w_dec": 0.02 * jax.random.normal(k3, (latent_dim, in_dim), jnp.float32),
    }


def model_forward(params, x, eps_key):
    # Encoder -> reparameterize -> decoder.  kl matches the usual VAE encoder.kl:
    # sum(sigma^2 + mu^2 - log(sigma) - 1/2)
    n = x.shape[0]
    xf = x.reshape(n, -1)
    mu = xf @ params["w_mu"]
    sigma = jnp.exp(xf @ params["w_sig"])
    eps = jax.random.normal(eps_key, mu.shape, jnp.float32)
    z = mu + sigma * eps
    kl = jnp.sum(sigma ** 2 + mu ** 2 - jnp.log(sigma) - 0.5)
    x_hat = (z @ params["w_dec"]).reshape(x.shape)
    return x_hat, kl


if __name__ == "__main__":
    key = jax.random.PRNGKey(0)
    kx, km, keps = jax.random.split(key, 3)

    # x in NCHW, like the PyTorch module would receive.
    x = jax.random.normal(kx, (2, 4, 16, 16), jnp.float32)

    params = make_model(km, in_dim=4 * 16 * 16, latent_dim=32)
    x_hat, kl = model_forward(params, x, keps)

    beta = 0.5
    loss = vae_loss_pallas(x, x_hat, kl, beta=beta)
    loss = jax.block_until_ready(loss)

    ref = jnp.sum((x - x_hat) ** 2) + beta * kl
    assert jnp.allclose(loss, ref, rtol=1e-5, atol=1e-5), (loss, ref)
    print("KERNEL_OK")
</pallas_src>

<mosaic_0001>
module attributes {stable_mosaic.version = 11 : i64} {
  func.func @kernel(%arg0: i32, %arg1: i32, %arg2: memref<16x128xf32, #tpu.memory_space<vmem>>, %arg3: memref<16x128xf32, #tpu.memory_space<vmem>>, %arg4: memref<1x8x128xf32, #tpu.memory_space<vmem>>, %arg5: memref<8x128xf32, #tpu.memory_space<vmem>>) attributes {dimension_semantics = [#tpu.dimension_semantics<arbitrary>, #tpu.dimension_semantics<arbitrary>], iteration_bounds = array<i64: 1, 1>, scalar_prefetch = 0 : i64, scratch_operands = 1 : i64, tpu.core_type = #tpu.core_type<tc>, window_params = [{transform_indices = @transform_0, window_bounds = array<i64: 16, 128>}, {transform_indices = @transform_1, window_bounds = array<i64: 16, 128>}, {transform_indices = @transform_2, window_bounds = array<i64: 1, 8, 128>}]} {
    %c0_i32 = arith.constant 0 : i32
    %0 = arith.cmpi eq, %arg1, %c0_i32 : i32
    %1 = arith.extui %0 : i1 to i32
    %c0_i32_0 = arith.constant 0 : i32
    %2 = arith.cmpi ne, %1, %c0_i32_0 : i32
    scf.if %2 {
      %cst = arith.constant 0.000000e+00 : f32
      %21 = vector.broadcast %cst : f32 to vector<8x128xf32>
      %c0_12 = arith.constant 0 : index
      %c0_13 = arith.constant 0 : index
      %22 = vector.load %arg5[%c0_12, %c0_13] : memref<8x128xf32, #tpu.memory_space<vmem>>, vector<8x128xf32>
      tpu.vector_store %arg5[%c0_12, %c0_13], %21 {strides = array<i32>} : memref<8x128xf32, #tpu.memory_space<vmem>>, vector<8x128xf32>,
    } else {
    }
    %c0 = arith.constant 0 : index
    %c0_1 = arith.constant 0 : index
    %3 = vector.load %arg2[%c0, %c0_1] : memref<16x128xf32, #tpu.memory_space<vmem>>, vector<16x128xf32>
    %c0_2 = arith.constant 0 : index
    %c0_3 = arith.constant 0 : index
    %4 = vector.load %arg3[%c0_2, %c0_3] : memref<16x128xf32, #tpu.memory_space<vmem>>, vector<16x128xf32>
    %5 = arith.subf %3, %4 : vector<16x128xf32>
    %6 = arith.mulf %5, %5 : vector<16x128xf32>
    %c1_i32 = arith.constant 1 : i32
    %7 = arith.muli %arg0, %c1_i32 : i32
    %8 = arith.addi %7, %arg1 : i32
    %c16_i32 = arith.constant 16 : i32
    %9 = arith.muli %8, %c16_i32 : i32
    %c16_i32_4 = arith.constant 16 : i32
    %10 = arith.addi %9, %c16_i32_4 : i32
    %c16_i32_5 = arith.constant 16 : i32
    %11 = arith.cmpi sle, %10, %c16_i32_5 : i32
    %12 = arith.extui %11 : i1 to i32
    %c0_i32_6 = arith.constant 0 : i32
    %13 = arith.cmpi ne, %12, %c0_i32_6 : i32
    scf.if %13 {
      %c0_12 = arith.constant 0 : index
      %c0_13 = arith.constant 0 : index
      %21 = vector.load %arg5[%c0_12, %c0_13] : memref<8x128xf32, #tpu.memory_space<vmem>>, vector<8x128xf32>
      %22 = vector.shape_cast %6 : vector<16x128xf32> to vector<2x8x128xf32>
      %cst = arith.constant dense<0.000000e+00> : vector<8x128xf32>
      %23 = vector.multi_reduction <add>, %22, %cst [0] : vector<2x8x128xf32> to vector<8x128xf32>
      %24 = arith.addf %21, %23 : vector<8x128xf32>
      %c0_14 = arith.constant 0 : index
      %c0_15 = arith.constant 0 : index
      %25 = vector.load %arg5[%c0_14, %c0_15] : memref<8x128xf32, #tpu.memory_space<vmem>>, vector<8x128xf32>
      tpu.vector_store %arg5[%c0_14, %c0_15], %24 {strides = array<i32>} : memref<8x128xf32, #tpu.memory_space<vmem>>, vector<8x128xf32>,
    } else {
    }
    %c16_i32_7 = arith.constant 16 : i32
    %14 = arith.addi %9, %c16_i32_7 : i32
    %c16_i32_8 = arith.constant 16 : i32
    %15 = arith.cmpi sgt, %14, %c16_i32_8 : i32
    %16 = arith.extui %15 : i1 to i32
    %c0_i32_9 = arith.constant 0 : i32
    %17 = arith.cmpi ne, %16, %c0_i32_9 : i32
    scf.if %17 {
      %21 = tpu.iota {dimensions = array<i32: 0>} : vector<16x128xi32>
      %22 = vector.broadcast %9 : i32 to vector<16x128xi32>
      %23 = arith.addi %21, %22 : vector<16x128xi32>
      %c16_i32_12 = arith.constant 16 : i32
      %24 = vector.broadcast %c16_i32_12 : i32 to vector<16x128xi32>
      %25 = arith.cmpi slt, %23, %24 : vector<16x128xi32>
      %cst = arith.constant 0.000000e+00 : f32
      %26 = vector.broadcast %cst : f32 to vector<16x128xf32>
      %27 = arith.select %25, %6, %26 : vector<16x128xi1>, vector<16x128xf32>
      %c0_13 = arith.constant 0 : index
      %c0_14 = arith.constant 0 : index
      %28 = vector.load %arg5[%c0_13, %c0_14] : memref<8x128xf32, #tpu.memory_space<vmem>>, vector<8x128xf32>
      %29 = vector.shape_cast %27 : vector<16x128xf32> to vector<2x8x128xf32>
      %cst_15 = arith.constant dense<0.000000e+00> : vector<8x128xf32>
      %30 = vector.multi_reduction <add>, %29, %cst_15 [0] : vector<2x8x128xf32> to vector<8x128xf32>
      %31 = arith.addf %28, %30 : vector<8x128xf32>
      %c0_16 = arith.constant 0 : index
      %c0_17 = arith.constant 0 : index
      %32 = vector.load %arg5[%c0_16, %c0_17] : memref<8x128xf32, #tpu.memory_space<vmem>>, vector<8x128xf32>
      tpu.vector_store %arg5[%c0_16, %c0_17], %31 {strides = array<i32>} : memref<8x128xf32, #tpu.memory_space<vmem>>, vector<8x128xf32>,
    } else {
    }
    %c0_i32_10 = arith.constant 0 : i32
    %18 = arith.cmpi eq, %arg1, %c0_i32_10 : i32
    %19 = arith.extui %18 : i1 to i32
    %c0_i32_11 = arith.constant 0 : i32
    %20 = arith.cmpi ne, %19, %c0_i32_11 : i32
    scf.if %20 {
      %c0_12 = arith.constant 0 : index
      %c0_13 = arith.constant 0 : index
      %21 = vector.load %arg5[%c0_12, %c0_13] : memref<8x128xf32, #tpu.memory_space<vmem>>, vector<8x128xf32>
      %c0_14 = arith.constant 0 : index
      %c0_15 = arith.constant 0 : index
      %c0_16 = arith.constant 0 : index
      %22 = vector.load %arg4[%c0_14, %c0_15, %c0_16] : memref<1x8x128xf32, #tpu.memory_space<vmem>>, vector<1x8x128xf32>
      %23 = vector.shape_cast %22 : vector<1x8x128xf32> to vector<8x128xf32>
      %24 = vector.shape_cast %21 : vector<8x128xf32> to vector<1x8x128xf32>
      tpu.vector_store %arg4[%c0_14, %c0_15, %c0_16], %24 {strides = array<i32>} : memref<1x8x128xf32, #tpu.memory_space<vmem>>, vector<1x8x128xf32>,
    } else {
    }
    return
  }
  func.func @transform_0(%arg0: i32, %arg1: i32) -> (i32, i32) {
    %c1_i32 = arith.constant 1 : i32
    %0 = arith.muli %arg0, %c1_i32 : i32
    %1 = arith.addi %0, %arg1 : i32
    %c0_i32 = arith.constant 0 : i32
    %2 = arith.minsi %1, %c0_i32 : i32
    %c0_i32_0 = arith.constant 0 : i32
    %c0_i32_1 = arith.constant 0 : i32
    return %2, %c0_i32_0 : i32, i32
  }
  func.func @transform_1(%arg0: i32, %arg1: i32) -> (i32, i32) {
    %c1_i32 = arith.constant 1 : i32
    %0 = arith.muli %arg0, %c1_i32 : i32
    %1 = arith.addi %0, %arg1 : i32
    %c0_i32 = arith.constant 0 : i32
    %2 = arith.minsi %1, %c0_i32 : i32
    %c0_i32_0 = arith.constant 0 : i32
    %c0_i32_1 = arith.constant 0 : i32
    return %2, %c0_i32_0 : i32, i32
  }
  func.func @transform_2(%arg0: i32, %arg1: i32) -> (i32, i32, i32) {
    %c0_i32 = arith.constant 0 : i32
    %c0_i32_0 = arith.constant 0 : i32
    %c0_i32_1 = arith.constant 0 : i32
    return %arg0, %c0_i32, %c0_i32_0 : i32, i32, i32
  }
}

</mosaic_0001>

<llo_original>
// kernel: tpu_custom_call.1
$region0: #{tpu_custom_call.1}
  #allocation0 [shape = 'u32[]', space=smem, size = 0x4, offset = 0x4, fixed_abs, tag = 'smem constant byte address 0x4 - core index']
  #allocation1 [shape = 'u32[144,128]{1,0:T(1,128)}', space=vmem, size = 0x12000, scoped, tag = 'internal scratch']
  #allocation2 [shape = 'f32[8,128]{1,0:T(8,128)}', space=vmem, size = 0x1000, scoped, tag = 'scratch operand']
  %s0 = inlined_call_operand.hbm [shape: f32[16,128], index: 0, kind: input, shape index: {}]
  %s1 = inlined_call_operand.hbm [shape: f32[16,128], index: 1, kind: input, shape index: {}]
  %s2 = inlined_call_operand.hbm [shape: f32[1,8,128], index: 2, kind: output, shape index: {}]
  %s3 = sld [smem:[#allocation0]]
  $region42: #{tpu_custom_call.1} parent=0
    _
  %s5 = ssub.s32 1, %s3
  %s6 = scalar_select 0, %s5, %s3
  $region1: #{tpu_custom_call.1} parent=0
    #allocation3 [shape = 'u8[8192]{0}', space=vmem, size = 0x2000, scoped, tag = 'input window, operand 0, single buffered']
    #allocation4 [shape = 's32[1]{0}', space=sflag, size = 0x4, scoped, tag = 'scoped memory for tpu_custom_call.1']
    #allocation5 [shape = 's32[1]{0}', space=sflag, size = 0x4, scoped, tag = 'scoped memory for tpu_custom_call.1']
    #allocation6 [shape = 'u8[8192]{0}', space=vmem, size = 0x2000, scoped, tag = 'input window, operand 1, single buffered']
    #allocation7 [shape = 's32[1]{0}', space=sflag, size = 0x4, scoped, tag = 'scoped memory for tpu_custom_call.1']
    #allocation8 [shape = 'u8[4096]{0}', space=vmem, size = 0x1000, scoped, tag = 'output window, operand 0, single buffered']
    %7 = vsyncpa [#allocation4], 0
    %8 = vsyncpa [#allocation7], 0
    %9 = vsyncpa [#allocation5], 0
    // Predicated region
    $region2: #{tpu_custom_call.1} parent=1 // pred_check
      _
    $region3: #{tpu_custom_call.1} parent=1 // pred_check_branch
      %11 = sbr.rel (0) target = $region5
    $region4: #{tpu_custom_call.1} parent=1 // pred_region
      %s12 = sadd.s32 0, 0
      %p13 = scmp.lt.s32.totalorder %s12, 0
      %s14 = scalar_select %p13, %s12, 0
      %s15 = smul.u32 2, %s14
      %s17 = ssub.s32 256, 256
      %18 = vsyncadd [#allocation4], %s17
      %s19 = smul.addr %s15, 128
      %s20 = scalar_lea.hbm %s0, %s19
      %s21 = sshll.u32 [#allocation3], 4
      %s22 = int_to_ptr.vmem [resolvable:$true] %s21
      %27 = dma.hbm_to_vmem [thread:$0]  %s20, 256, %s22, [#allocation4], 128, 128, 8
    $region5: #{tpu_custom_call.1} parent=1 // pred_fallthru
      _
    // Predicated region
    $region6: #{tpu_custom_call.1} parent=1 // pred_check
      _
    $region7: #{tpu_custom_call.1} parent=1 // pred_check_branch
      %29 = sbr.rel (0) target = $region9
    $region8: #{tpu_custom_call.1} parent=1 // pred_region
      %s30 = sadd.s32 0, 0
      %p31 = scmp.lt.s32.totalorder %s30, 0
      %s32 = scalar_select %p31, %s30, 0
      %s33 = smul.u32 2, %s32
      %s35 = ssub.s32 256, 256
      %36 = vsyncadd [#allocation7], %s35
      %s37 = smul.addr %s33, 128
      %s38 = scalar_lea.hbm %s1, %s37
      %s39 = sshll.u32 [#allocation6], 4
      %s40 = int_to_ptr.vmem [resolvable:$true] %s39
      %45 = dma.hbm_to_vmem [thread:$0]  %s38, 256, %s40, [#allocation7], 128, 128, 8
    $region9: #{tpu_custom_call.1} parent=1 // pred_fallthru
      _
    // Predicated region
    $region10: #{tpu_custom_call.1} parent=1 // pred_check
      _
    $region11: #{tpu_custom_call.1} parent=1 // pred_check_branch
      %47 = sbr.rel (0) target = $region13
    $region12: #{tpu_custom_call.1} parent=1 // pred_region
      %48 = dma.done [#allocation4], 256
    $region13: #{tpu_custom_call.1} parent=1 // pred_fallthru
      _
    // Predicated region
    $region14: #{tpu_custom_call.1} parent=1 // pred_check
      _
    $region15: #{tpu_custom_call.1} parent=1 // pred_check_branch
      %50 = sbr.rel (0) target = $region17
    $region16: #{tpu_custom_call.1} parent=1 // pred_region
      %51 = dma.done [#allocation7], 256
    $region17: #{tpu_custom_call.1} parent=1 // pred_fallthru
      _
    %s52 = sadd.s32 0, 0
    %p53 = scmp.lt.s32.totalorder %s52, 0
    %s54 = scalar_select %p53, %s52, 0
    %s55 = smul.u32 2, %s54
    %s56 = sadd.s32 0, 0
    %p57 = scmp.lt.s32.totalorder %s56, 0
    %s58 = scalar_select %p57, %s56, 0
    %s59 = smul.u32 2, %s58
    %p60 = scmp.eq.s32.totalorder 0, 0
    // Predicated region
    $region18: #{tpu_custom_call.1} parent=1 // pred_check
      %p61 = pneg %p60
    $region19: #{tpu_custom_call.1} parent=1 // pred_check_branch
      %63 = sbr.rel (%p61) target = $region21
    $region20: #{tpu_custom_call.1} parent=1 // pred_region
      %64 = vst [vmem:[#allocation2] sm:$0xff] 0.0
    $region21: #{tpu_custom_call.1} parent=1 // pred_fallthru
      _
    %v65 = vld [vmem:[#allocation3] sm:$0xff]
    %v66 = vld [vmem:[#allocation3 + $0x8] sm:$0xff]
    %v67 = vld [vmem:[#allocation6] sm:$0xff]
    %v68 = vld [vmem:[#allocation6 + $0x8] sm:$0xff]
    %v69 = vsub.f32 %v65, %v67
    %v70 = vsub.f32 %v66, %v68
    %v71 = vmul.f32 %v69, %v69
    %v72 = vmul.f32 %v70, %v70
    %s73 = sadd.s32 0, 0
    %s74 = smul.u32 %s73, 16
    %s75 = sadd.s32 %s74, 16
    %p76 = scmp.le.s32.totalorder %s75, 16
    // Predicated region
    $region22: #{tpu_custom_call.1} parent=1 // pred_check
      %p77 = pneg %p76
    $region23: #{tpu_custom_call.1} parent=1 // pred_check_branch
      %79 = sbr.rel (%p77) target = $region25
    $region24: #{tpu_custom_call.1} parent=1 // pred_region
      %v80 = vld [vmem:[#allocation2] sm:$0xff]
      %v81 = vadd.f32 %v71, %v72
      %v82 = vadd.f32 %v80, %v81
      %83 = vst [vmem:[#allocation2] sm:$0xff] %v82
    $region25: #{tpu_custom_call.1} parent=1 // pred_fallthru
      _
    %p84 = scmp.gt.s32.totalorder %s75, 16
    // Predicated region
    $region26: #{tpu_custom_call.1} parent=1 // pred_check
      %p85 = pneg %p84
    $region27: #{tpu_custom_call.1} parent=1 // pred_check_branch
      %87 = sbr.rel (%p85) target = $region29
    $region28: #{tpu_custom_call.1} parent=1 // pred_region
      %v88 = vlaneseq
      %v89 = vshrl.u32 %v88, 7
      %v90 = vadd.s32 %v89, 8
      %v91 = vstv %s74
      %v92 = vadd.s32 %v89, %v91
      %v93 = vadd.s32 %v90, %v91
      %vm94 = vcmp.lt.s32.totalorder %v92, 16
      %vm95 = vcmp.lt.s32.totalorder %v93, 16
      %v96 = vsel %vm94, %v71, 0.0
      %v97 = vsel %vm95, %v72, 0.0
      %v98 = vld [vmem:[#allocation2] sm:$0xff]
      %v99 = vadd.f32 %v96, %v97
      %v100 = vadd.f32 %v98, %v99
      %101 = vst [vmem:[#allocation2] sm:$0xff] %v100
    $region29: #{tpu_custom_call.1} parent=1 // pred_fallthru
      _
    // Predicated region
    $region30: #{tpu_custom_call.1} parent=1 // pred_check
      %p102 = pneg %p60
    $region31: #{tpu_custom_call.1} parent=1 // pred_check_branch
      %104 = sbr.rel (%p102) target = $region33
    $region32: #{tpu_custom_call.1} parent=1 // pred_region
      %v105 = vld [vmem:[#allocation2] sm:$0xff]
      %106 = vst [vmem:[#allocation8] sm:$0xff] %v105
    $region33: #{tpu_custom_call.1} parent=1 // pred_fallthru
      _
    // Predicated region
    $region34: #{tpu_custom_call.1} parent=1 // pred_check
      _
    $region35: #{tpu_custom_call.1} parent=1 // pred_check_branch
      %108 = sbr.rel (0) target = $region37
    $region36: #{tpu_custom_call.1} parent=1 // pred_region
      %s110 = ssub.s32 128, 128
      %111 = vsyncadd [#allocation5], %s110
      %s113 = sshll.u32 [#allocation8], 4
      %s114 = int_to_ptr.vmem [resolvable:$true] %s113
      %116 = dma.vmem_to_hbm [thread:$0]  %s114, 128, %s2, [#allocation5]
    $region37: #{tpu_custom_call.1} parent=1 // pred_fallthru
      _
    // Predicated region
    $region38: #{tpu_custom_call.1} parent=1 // pred_check
      _
    $region39: #{tpu_custom_call.1} parent=1 // pred_check_branch
      %118 = sbr.rel (0) target = $region41
    $region40: #{tpu_custom_call.1} parent=1 // pred_region
      %119 = dma.done [#allocation5], 128
    $region41: #{tpu_custom_call.1} parent=1 // pred_fallthru
      _
    %120 = vsyncpa [#allocation4], 1
    %121 = vsyncpa [#allocation7], 1
    %122 = vsyncpa [#allocation5], 1

</llo_original>
